<compile_context>
chip_gen: v7x
topology: tpu7x:2x2x1
jax: 0.10.0
libtpu: 0.0.40
codegen_flags: <defaults>
</compile_context>

<pallas_src>
import functools

import jax
import jax.numpy as jnp
from jax.experimental import pallas as pl
from jax.experimental.pallas import tpu as pltpu


def _round_up(x, m):
    return (x + m - 1) // m * m


def _rpn_head_kernel(x_ref, w_ref, b_ref, cls_ref, bbox_ref, *, num_anchors,
                     a_pad):
    # x_ref:    (1, C, TM)        tile of pixels (lane dim = pixels)
    # w_ref:    (a_pad + 4A, C)   packed [w_cls (padded to a_pad rows); w_bbox]
    # b_ref:    (a_pad + 4A, 1)   packed bias, f32
    # cls_ref:  (1, A, TM)        cls_logits tile  (channel-major, lane-dense)
    # bbox_ref: (1, 4A, TM)       bbox_pred tile
    x = x_ref[0]                                                   # (C, TM)
    out = jnp.dot(w_ref[...], x, preferred_element_type=jnp.float32)
    out = out + b_ref[...]                                         # (rows, TM) f32
    cls_ref[0] = out[:num_anchors].astype(cls_ref.dtype)
    bbox_ref[0] = out[a_pad:].astype(bbox_ref.dtype)               # sublane-aligned split


@functools.partial(jax.jit, static_argnames=("num_anchors", "tile_m"))
def _rpn_head_packed(x, w_packed, b_packed, *, num_anchors, tile_m=1024):
    """x: (N, C, M) pixels-last.  Returns ((N, A, M), (N, 4A, M))."""
    N, C, M = x.shape
    A = num_anchors
    rows = w_packed.shape[0]          # a_pad + 4A
    a_pad = rows - 4 * A
    out_dtype = x.dtype

    # MXU operand dtype follows the activations (supply bf16 upstream to halve
    # the dominant HBM read); weights are tiny, cast them to match.
    w = w_packed.astype(x.dtype)
    b = b_packed.astype(jnp.float32)

    # Per-level pixel tile: lane-aligned, capped by the level size (no jnp.pad
    # of x, no output slice copy -- Pallas masks the ragged final block).
    tile = min(tile_m, _round_up(M, 128))
    # Keep both v7x TensorCores busy even for N == 1 on a small level.
    if N * pl.cdiv(M, tile) < 2 and tile > 128:
        tile = max(128, _round_up(pl.cdiv(M, 2), 128))
    grid = (N, pl.cdiv(M, tile))

    x_isz = jnp.dtype(x.dtype).itemsize
    o_isz = jnp.dtype(out_dtype).itemsize
    w_isz = jnp.dtype(w.dtype).itemsize
    cost = pl.CostEstimate(
        flops=2 * N * M * C * 5 * A,
        transcendentals=0,
        bytes_accessed=(N * C * M * x_isz           # x read
                        + N * 5 * A * M * o_isz     # outputs written
                        + rows * C * w_isz          # weights
                        + rows * 4),                # bias
    )

    cls_out, bbox_out = pl.pallas_call(
        functools.partial(_rpn_head_kernel, num_anchors=A, a_pad=a_pad),
        out_shape=(
            jax.ShapeDtypeStruct((N, A, M), out_dtype),
            jax.ShapeDtypeStruct((N, 4 * A, M), out_dtype),
        ),
        grid=grid,
        in_specs=[
            pl.BlockSpec((1, C, tile), lambda n, i: (n, 0, i)),   # x tile
            pl.BlockSpec((rows, C), lambda n, i: (0, 0)),         # packed W (resident)
            pl.BlockSpec((rows, 1), lambda n, i: (0, 0)),         # packed bias
        ],
        out_specs=(
            pl.BlockSpec((1, A, tile), lambda n, i: (n, 0, i)),
            pl.BlockSpec((1, 4 * A, tile), lambda n, i: (n, 0, i)),
        ),
        compiler_params=pltpu.CompilerParams(
            dimension_semantics=("parallel", "parallel"),
            vmem_limit_bytes=32 * 1024 * 1024),
        cost_estimate=cost,
    )(x, w, b)

    return cls_out, bbox_out


def rpn_head_conv_regressor_forward(xs, params, *, tile_m=1024):
    """Mirrors RPNHeadConvRegressor.forward.

    Args:
      xs: list/tuple of feature maps, each NCHW (N, C, H, W).  Supply bf16
          activations to halve the kernel's dominant HBM read (f32 accum).
      params: dict from init_params/pack_params (packed, sublane-aligned).
      tile_m: max pixel-tile width (lane dimension); capped per level.
    Returns:
      (logits, bbox_reg): lists of NCHW arrays with A and 4A channels.
    """
    assert isinstance(xs, (list, tuple))
    w_packed = params["w_packed"]
    b_packed = params["b_packed"]
    A = params["num_anchors"]

    logits, bbox_reg = [], []
    for y in xs:
        N, C, H, W = y.shape
        cls_l, bbox_l = _rpn_head_packed(
            y.reshape(N, C, H * W), w_packed, b_packed,
            num_anchors=A, tile_m=tile_m)
        logits.append(cls_l.reshape(N, A, H, W))
        bbox_reg.append(bbox_l.reshape(N, 4 * A, H, W))
    return logits, bbox_reg


def pack_params(w_cls, b_cls, w_bbox, b_bbox):
    """Pack the two 1x1-conv heads into one (a_pad + 4A, C) weight.

    PyTorch conv weights are (out, in, 1, 1); pass them squeezed to (out, in).
    cls rows are zero-padded to a multiple of 8 so the bbox slice starts on a
    sublane-tile boundary inside the kernel.
    """
    A, C = w_cls.shape
    a_pad = max(_round_up(A, 8), 8)
    w = jnp.zeros((a_pad + 4 * A, C), w_cls.dtype)
    w = w.at[:A].set(w_cls).at[a_pad:].set(w_bbox)
    b = jnp.zeros((a_pad + 4 * A, 1), jnp.float32)
    b = b.at[:A, 0].set(b_cls.astype(jnp.float32))
    b = b.at[a_pad:, 0].set(b_bbox.astype(jnp.float32))
    return {"w_packed": w, "b_packed": b, "num_anchors": A}


def init_params(key, in_channels, num_anchors, dtype=jnp.float32):
    """Matches torch init: weight ~ N(0, 0.01), bias = 0."""
    k1, k2 = jax.random.split(key)
    w_cls = jax.random.normal(k1, (num_anchors, in_channels), dtype) * 0.01
    w_bbox = jax.random.normal(k2, (num_anchors * 4, in_channels), dtype) * 0.01
    b_cls = jnp.zeros((num_anchors,), dtype)
    b_bbox = jnp.zeros((num_anchors * 4,), dtype)
    return pack_params(w_cls, b_cls, w_bbox, b_bbox)


if __name__ == "__main__":
    key = jax.random.PRNGKey(0)
    kp, kx0, kx1 = jax.random.split(key, 3)

    in_channels = 4
    num_anchors = 3
    params = init_params(kp, in_channels, num_anchors)

    # Two feature-map levels (FPN-style list input), NCHW.
    x0 = jax.random.normal(kx0, (2, in_channels, 16, 16), jnp.float32)
    x1 = jax.random.normal(kx1, (2, in_channels, 8, 8), jnp.float32)
    xs = [x0, x1]

    # f32 path (exact).
    logits, bbox_reg = rpn_head_conv_regressor_forward(xs, params)
    jax.block_until_ready((logits, bbox_reg))

    # bf16-activation path (as if upstream produced bf16 features): halves the
    # dominant HBM read, f32 accumulation inside the kernel.
    xs_bf16 = [y.astype(jnp.bfloat16) for y in xs]
    logits_bf16, bbox_bf16 = rpn_head_conv_regressor_forward(xs_bf16, params)
    jax.block_until_ready((logits_bf16, bbox_bf16))

    # Sanity check against a pure-JAX 1x1-conv reference.
    a_pad = params["w_packed"].shape[0] - 4 * num_anchors
    w_cls = params["w_packed"][:num_anchors]            # (A, C)
    w_bbox = params["w_packed"][a_pad:]                 # (4A, C)
    b_cls = params["b_packed"][:num_anchors, 0]
    b_bbox = params["b_packed"][a_pad:, 0]
    for lvl, y in enumerate(xs):
        ref_lg = (jnp.einsum("nchw,ac->nahw", y, w_cls)
                  + b_cls[None, :, None, None])
        ref_bb = (jnp.einsum("nchw,ac->nahw", y, w_bbox)
                  + b_bbox[None, :, None, None])
        assert logits[lvl].shape == (y.shape[0], num_anchors,
                                     y.shape[2], y.shape[3])
        assert bbox_reg[lvl].shape == (y.shape[0], num_anchors * 4,
                                       y.shape[2], y.shape[3])
        assert jnp.allclose(logits[lvl], ref_lg, atol=1e-5), "cls_logits mismatch"
        assert jnp.allclose(bbox_reg[lvl], ref_bb, atol=1e-5), "bbox_pred mismatch"
        assert jnp.allclose(logits_bf16[lvl].astype(jnp.float32), ref_lg,
                            atol=3e-3), "bf16 cls mismatch"
        assert jnp.allclose(bbox_bf16[lvl].astype(jnp.float32), ref_bb,
                            atol=3e-3), "bf16 bbox mismatch"

    print("KERNEL_OK")
</pallas_src>

<mosaic_0001>
module attributes {stable_mosaic.version = 11 : i64} {
  func.func @_rpn_head_kernel(%arg0: i32, %arg1: i32, %arg2: memref<1x4x256xf32, #tpu.memory_space<vmem>>, %arg3: memref<20x4xf32, #tpu.memory_space<vmem>>, %arg4: memref<20x1xf32, #tpu.memory_space<vmem>>, %arg5: memref<1x3x256xf32, #tpu.memory_space<vmem>>, %arg6: memref<1x12x256xf32, #tpu.memory_space<vmem>>) attributes {dimension_semantics = [#tpu.dimension_semantics<parallel>, #tpu.dimension_semantics<parallel>], iteration_bounds = array<i64: 2, 1>, scalar_prefetch = 0 : i64, scratch_operands = 0 : i64, tpu.core_type = #tpu.core_type<tc>, window_params = [{transform_indices = @transform_0, window_bounds = array<i64: 1, 4, 256>}, {pipeline_mode = #tpu.pipeline_mode<synchronous>, transform_indices = @transform_1, window_bounds = array<i64: 20, 4>}, {pipeline_mode = #tpu.pipeline_mode<synchronous>, transform_indices = @transform_2, window_bounds = array<i64: 20, 1>}, {transform_indices = @transform_3, window_bounds = array<i64: 1, 3, 256>}, {transform_indices = @transform_4, window_bounds = array<i64: 1, 12, 256>}]} {
    %c0 = arith.constant 0 : index
    %c0_0 = arith.constant 0 : index
    %c0_1 = arith.constant 0 : index
    %0 = vector.load %arg2[%c0, %c0_0, %c0_1] : memref<1x4x256xf32, #tpu.memory_space<vmem>>, vector<1x4x256xf32>
    %1 = vector.shape_cast %0 : vector<1x4x256xf32> to vector<4x256xf32>
    %c0_2 = arith.constant 0 : index
    %c0_3 = arith.constant 0 : index
    %2 = vector.load %arg3[%c0_2, %c0_3] : memref<20x4xf32, #tpu.memory_space<vmem>>, vector<20x4xf32>
    %cst = arith.constant dense<0.000000e+00> : vector<20x256xf32>
    %3 = tpu.matmul %2, %1, %cst {dimension_numbers = #tpu.dot_dimension_numbers<[1], [0], [0], [1], [0, 0, 1, 1], [], []>} : vector<20x4xf32>, vector<4x256xf32>, vector<20x256xf32> -> vector<20x256xf32>
    %c0_4 = arith.constant 0 : index
    %c0_5 = arith.constant 0 : index
    %4 = vector.load %arg4[%c0_4, %c0_5] : memref<20x1xf32, #tpu.memory_space<vmem>>, vector<20x1xf32>
    %5 = vector.broadcast %4 : vector<20x1xf32> to vector<20x256xf32>
    %6 = arith.addf %3, %5 : vector<20x256xf32>
    %7 = vector.extract_strided_slice %6 {offsets = [0, 0], sizes = [3, 256], strides = [1, 1]} : vector<20x256xf32> to vector<3x256xf32>
    %c0_6 = arith.constant 0 : index
    %c0_7 = arith.constant 0 : index
    %c0_8 = arith.constant 0 : index
    %8 = vector.load %arg5[%c0_6, %c0_7, %c0_8] : memref<1x3x256xf32, #tpu.memory_space<vmem>>, vector<1x3x256xf32>
    %9 = vector.shape_cast %8 : vector<1x3x256xf32> to vector<3x256xf32>
    %10 = vector.shape_cast %7 : vector<3x256xf32> to vector<1x3x256xf32>
    tpu.vector_store %arg5[%c0_6, %c0_7, %c0_8], %10 {strides = array<i32>} : memref<1x3x256xf32, #tpu.memory_space<vmem>>, vector<1x3x256xf32>,
    %11 = vector.extract_strided_slice %6 {offsets = [8, 0], sizes = [12, 256], strides = [1, 1]} : vector<20x256xf32> to vector<12x256xf32>
    %c0_9 = arith.constant 0 : index
    %c0_10 = arith.constant 0 : index
    %c0_11 = arith.constant 0 : index
    %12 = vector.load %arg6[%c0_9, %c0_10, %c0_11] : memref<1x12x256xf32, #tpu.memory_space<vmem>>, vector<1x12x256xf32>
    %13 = vector.shape_cast %12 : vector<1x12x256xf32> to vector<12x256xf32>
    %14 = vector.shape_cast %11 : vector<12x256xf32> to vector<1x12x256xf32>
    tpu.vector_store %arg6[%c0_9, %c0_10, %c0_11], %14 {strides = array<i32>} : memref<1x12x256xf32, #tpu.memory_space<vmem>>, vector<1x12x256xf32>,
    return
  }
  func.func @transform_0(%arg0: i32, %arg1: i32) -> (i32, i32, i32) {
    %c0_i32 = arith.constant 0 : i32
    %c0_i32_0 = arith.constant 0 : i32
    return %arg0, %c0_i32, %arg1 : i32, i32, i32
  }
  func.func @transform_1(%arg0: i32, %arg1: i32) -> (i32, i32) {
    %c0_i32 = arith.constant 0 : i32
    %c0_i32_0 = arith.constant 0 : i32
    %c0_i32_1 = arith.constant 0 : i32
    return %c0_i32, %c0_i32_0 : i32, i32
  }
  func.func @transform_2(%arg0: i32, %arg1: i32) -> (i32, i32) {
    %c0_i32 = arith.constant 0 : i32
    %c0_i32_0 = arith.constant 0 : i32
    %c0_i32_1 = arith.constant 0 : i32
    return %c0_i32, %c0_i32_0 : i32, i32
  }
  func.func @transform_3(%arg0: i32, %arg1: i32) -> (i32, i32, i32) {
    %c0_i32 = arith.constant 0 : i32
    %c0_i32_0 = arith.constant 0 : i32
    return %arg0, %c0_i32, %arg1 : i32, i32, i32
  }
  func.func @transform_4(%arg0: i32, %arg1: i32) -> (i32, i32, i32) {
    %c0_i32 = arith.constant 0 : i32
    %c0_i32_0 = arith.constant 0 : i32
    return %arg0, %c0_i32, %arg1 : i32, i32, i32
  }
}

</mosaic_0001>

<llo_original>
// kernel: _rpn_head_packed.1
$region0: #{_rpn_head_packed.1}
  #allocation0 [shape = 'u32[]', space=smem, size = 0x4, offset = 0x4, fixed_abs, tag = 'smem constant byte address 0x4 - core index']
  #allocation1 [shape = 'u32[144,128]{1,0:T(1,128)}', space=vmem, size = 0x12000, scoped, tag = 'internal scratch']
  %s0 = inlined_call_operand.vmem [shape: f32[2,4,256], index: 0, kind: input, shape index: {}]
  %s1 = inlined_call_operand.vmem [shape: f32[20,4], index: 1, kind: input, shape index: {}]
  %s2 = inlined_call_operand.vmem [shape: f32[20,1], index: 2, kind: input, shape index: {}]
  %s3 = inlined_call_operand.vmem [shape: f32[2,3,256], index: 3, kind: output, shape index: {0}]
  %s4 = inlined_call_operand.vmem [shape: f32[2,12,256], index: 4, kind: output, shape index: {1}]
  %5 = xla_tuple %s3, %s4
  %s6 = sld [smem:[#allocation0]]
  $region53: #{_rpn_head_packed.1} parent=0
    _
  %s8 = ssub.s32 1, %s6
  %s9 = scalar_select 0, %s8, %s6
  loop: start=0, step=1, limit=4
  $region2: #{_rpn_head_packed.1} parent=0 // loop_pre_header
    _
  $region3: #{_rpn_head_packed.1} parent=0 // loop_header
    %s11 = sphi 0, %s15
    %p12 = scmp.ge.s32.totalorder %s11, 4
    %s18 = sphi 0, %s30
    %s19 = sphi 0, %s26
    %s20 = sphi 0, %s18
    %s21 = sphi 0, %s19
    %s22 = sphi 0, %s20
    %s23 = sphi 0, %s21
    %s35 = sphi 0, %s37
    %s38 = sphi 0, %s35
    %s39 = sphi 0, %s38
    %s55 = sphi 0, %s39
    %s59 = sphi 0, %s59
    %s61 = sphi 0, %s59
    %s62 = sphi 0, %s61
    %s76 = sphi 0, %s62
    %s80 = sphi 0, %s80
    %s82 = sphi 0, %s80
    %s83 = sphi 0, %s82
    %s97 = sphi 0, %s83
    %s105 = sphi 0, %s107
    %s108 = sphi 0, %s105
    %s109 = sphi 0, %s108
    %s125 = sphi 0, %s109
    %s133 = sphi 0, %s135
    %s136 = sphi 0, %s133
    %s137 = sphi 0, %s136
    %s153 = sphi 0, %s137
  $region4: #{_rpn_head_packed.1} parent=0 // loop_header_branch
    %14 = sbr.rel (%p12) target = $region8
  $region5: #{_rpn_head_packed.1} parent=0 // loop_body
    %s16 = ssub.s32 %s11, 1
    %s17 = ssub.s32 %s11, 2
    %s24 = sadd.s32 1, %s19
    %p25 = scmp.ge.s32.totalorder %s24, 1
    %s26 = scalar_select %p25, 0, %s24
    %s27 = sadd.s32 1, %s18
    %s28 = scalar_select %p25, %s27, %s18
    %p29 = scmp.ge.s32.totalorder %s28, 2
    %s30 = scalar_select %p29, 0, %s28
    %s31 = ssub.s32 %s18, %s30
    %s32 = ssub.s32 %s19, %s26
    %s33 = sor.u32 %s31, %s32
    %p34 = scmp.eq.s32.totalorder %s33, 0
    %s36 = sadd.s32 %s35, 1
    %s37 = scalar_select %p34, %s35, %s36
    %p40 = pneg %p34
    %p41 = scmp.eq.s32.totalorder %s11, 1
    %p42 = por %p40, %p41
    %p43 = scmp.ne.s32.totalorder %s35, %s38
    %p44 = scmp.eq.s32.totalorder %s11, 0
    %p45 = por %p43, %p44
    %p46 = scmp.ne.s32.totalorder %s35, %s38
    %p47 = scmp.eq.s32.totalorder %s16, 1
    %p48 = por %p46, %p47
    %p49 = scmp.ne.s32.totalorder %s38, %s39
    %p50 = scmp.eq.s32.totalorder %s16, 0
    %p51 = por %p49, %p50
    %p52 = scmp.ne.s32.totalorder %s38, %s39
    %p53 = scmp.eq.s32.totalorder %s17, 1
    %p54 = por %p52, %p53
    %p56 = scmp.ne.s32.totalorder %s39, %s55
    %p57 = scmp.eq.s32.totalorder %s17, 0
    %p58 = por %p56, %p57
    %s60 = sadd.s32 %s59, 1
    %p63 = scmp.eq.s32.totalorder %s11, 1
    %p64 = scmp.ne.s32.totalorder %s59, %s61
    %p65 = scmp.eq.s32.totalorder %s11, 0
    %p66 = por %p64, %p65
    %p67 = scmp.ne.s32.totalorder %s59, %s61
    %p68 = scmp.eq.s32.totalorder %s16, 1
    %p69 = por %p67, %p68
    %p70 = scmp.ne.s32.totalorder %s61, %s62
    %p71 = scmp.eq.s32.totalorder %s16, 0
    %p72 = por %p70, %p71
    %p73 = scmp.ne.s32.totalorder %s61, %s62
    %p74 = scmp.eq.s32.totalorder %s17, 1
    %p75 = por %p73, %p74
    %p77 = scmp.ne.s32.totalorder %s62, %s76
    %p78 = scmp.eq.s32.totalorder %s17, 0
    %p79 = por %p77, %p78
    %s81 = sadd.s32 %s80, 1
    %p84 = scmp.eq.s32.totalorder %s11, 1
    %p85 = scmp.ne.s32.totalorder %s80, %s82
    %p86 = scmp.eq.s32.totalorder %s11, 0
    %p87 = por %p85, %p86
    %p88 = scmp.ne.s32.totalorder %s80, %s82
    %p89 = scmp.eq.s32.totalorder %s16, 1
    %p90 = por %p88, %p89
    %p91 = scmp.ne.s32.totalorder %s82, %s83
    %p92 = scmp.eq.s32.totalorder %s16, 0
    %p93 = por %p91, %p92
    %p94 = scmp.ne.s32.totalorder %s82, %s83
    %p95 = scmp.eq.s32.totalorder %s17, 1
    %p96 = por %p94, %p95
    %p98 = scmp.ne.s32.totalorder %s83, %s97
    %p99 = scmp.eq.s32.totalorder %s17, 0
    %p100 = por %p98, %p99
    %s101 = ssub.s32 %s18, %s30
    %s102 = ssub.s32 %s19, %s26
    %s103 = sor.u32 %s101, %s102
    %p104 = scmp.eq.s32.totalorder %s103, 0
    %s106 = sadd.s32 %s105, 1
    %s107 = scalar_select %p104, %s105, %s106
    %p110 = pneg %p104
    %p111 = scmp.eq.s32.totalorder %s11, 1
    %p112 = por %p110, %p111
    %p113 = scmp.ne.s32.totalorder %s105, %s108
    %p114 = scmp.eq.s32.totalorder %s11, 0
    %p115 = por %p113, %p114
    %p116 = scmp.ne.s32.totalorder %s105, %s108
    %p117 = scmp.eq.s32.totalorder %s16, 1
    %p118 = por %p116, %p117
    %p119 = scmp.ne.s32.totalorder %s108, %s109
    %p120 = scmp.eq.s32.totalorder %s16, 0
    %p121 = por %p119, %p120
    %p122 = scmp.ne.s32.totalorder %s108, %s109
    %p123 = scmp.eq.s32.totalorder %s17, 1
    %p124 = por %p122, %p123
    %p126 = scmp.ne.s32.totalorder %s109, %s125
    %p127 = scmp.eq.s32.totalorder %s17, 0
    %p128 = por %p126, %p127
    %s129 = ssub.s32 %s18, %s30
    %s130 = ssub.s32 %s19, %s26
    %s131 = sor.u32 %s129, %s130
    %p132 = scmp.eq.s32.totalorder %s131, 0
    %s134 = sadd.s32 %s133, 1
    %s135 = scalar_select %p132, %s133, %s134
    %p138 = pneg %p132
    %p139 = scmp.eq.s32.totalorder %s11, 1
    %p140 = por %p138, %p139
    %p141 = scmp.ne.s32.totalorder %s133, %s136
    %p142 = scmp.eq.s32.totalorder %s11, 0
    %p143 = por %p141, %p142
    %p144 = scmp.ne.s32.totalorder %s133, %s136
    %p145 = scmp.eq.s32.totalorder %s16, 1
    %p146 = por %p144, %p145
    %p147 = scmp.ne.s32.totalorder %s136, %s137
    %p148 = scmp.eq.s32.totalorder %s16, 0
    %p149 = por %p147, %p148
    %p150 = scmp.ne.s32.totalorder %s136, %s137
    %p151 = scmp.eq.s32.totalorder %s17, 1
    %p152 = por %p150, %p151
    %p154 = scmp.ne.s32.totalorder %s137, %s153
    %p155 = scmp.eq.s32.totalorder %s17, 0
    %p156 = por %p154, %p155
    %p157 = scmp.le.s32.totalorder 1, %s11
    %p158 = scmp.lt.s32.totalorder %s11, 3
    %p159 = pnand %p157, %p158
    %p160 = pneg %p159
    // Predicated region
    $region9: #{_rpn_head_packed.1} parent=5 // pred_check
      _
    $region10: #{_rpn_head_packed.1} parent=5 // pred_check_branch
      %162 = sbr.rel (%p159) target = $region12
    $region11: #{_rpn_head_packed.1} parent=5 // pred_region
      %s163 = ssub.s32 %s11, 1
      // Predicated region
      $region13: #{_rpn_head_packed.1} parent=11 // pred_check
        %p164 = pneg %p72
      $region14: #{_rpn_head_packed.1} parent=11 // pred_check_branch
        %166 = sbr.rel (%p164) target = $region16
      $region15: #{_rpn_head_packed.1} parent=11 // pred_region
        _
      $region16: #{_rpn_head_packed.1} parent=11 // pred_fallthru
        _
      // Predicated region
      $region17: #{_rpn_head_packed.1} parent=11 // pred_check
        %p167 = pneg %p93
      $region18: #{_rpn_head_packed.1} parent=11 // pred_check_branch
        %169 = sbr.rel (%p167) target = $region20
      $region19: #{_rpn_head_packed.1} parent=11 // pred_region
        _
      $region20: #{_rpn_head_packed.1} parent=11 // pred_fallthru
        _
    $region12: #{_rpn_head_packed.1} parent=5 // pred_fallthru
      _
    %p170 = scmp.lt.s32.totalorder %s11, 2
    // Predicated region
    $region21: #{_rpn_head_packed.1} parent=5 // pred_check
      %p171 = pneg %p170
    $region22: #{_rpn_head_packed.1} parent=5 // pred_check_branch
      %173 = sbr.rel (%p171) target = $region24
    $region23: #{_rpn_head_packed.1} parent=5 // pred_region
      // Predicated region
      $region25: #{_rpn_head_packed.1} parent=23 // pred_check
        %p174 = pneg %p45
      $region26: #{_rpn_head_packed.1} parent=23 // pred_check_branch
        %176 = sbr.rel (%p174) target = $region28
      $region27: #{_rpn_head_packed.1} parent=23 // pred_region
        %s177 = smul.u32 2, %s19
        %p178 = scmp.lt.s32.totalorder %s18, 1
        %s179 = scalar_select %p178, %s18, 1
        %p180 = scmp.lt.s32.totalorder %s177, 1
        %s181 = scalar_select %p180, %s177, 1
        %s182 = smul.addr %s179, 2
        %s183 = sadd.s32 %s181, %s182
        %s184 = smul.addr %s183, 4
        %s185 = scalar_lea.vmem %s0, %s184
        %s186 = smul.u32 2, %s19
      $region28: #{_rpn_head_packed.1} parent=23 // pred_fallthru
        _
    $region24: #{_rpn_head_packed.1} parent=5 // pred_fallthru
      _
    %p187 = scmp.le.s32.totalorder 1, %s11
    %p188 = scmp.lt.s32.totalorder %s11, 3
    %p189 = pnand %p187, %p188
    %p190 = pneg %p189
    // Predicated region
    $region29: #{_rpn_head_packed.1} parent=5 // pred_check
      _
    $region30: #{_rpn_head_packed.1} parent=5 // pred_check_branch
      %192 = sbr.rel (%p189) target = $region32
    $region31: #{_rpn_head_packed.1} parent=5 // pred_region
      %s193 = ssub.s32 %s11, 1
      %s194 = smul.u32 2, %s21
      %p195 = scmp.lt.s32.totalorder %s20, 1
      %s196 = scalar_select %p195, %s20, 1
      %p197 = scmp.lt.s32.totalorder %s194, 1
      %s198 = scalar_select %p197, %s194, 1
      %s199 = smul.addr %s196, 2
      %s200 = sadd.s32 %s198, %s199
      %s201 = smul.addr %s200, 4
      %s202 = scalar_lea.vmem %s0, %s201
      %p203 = pneg %p51
      %p204 = pneg %p48
      %p205 = pneg %p72
      %p206 = pneg %p69
      %p207 = pneg %p93
      %p208 = pneg %p90
      %p209 = pneg %p121
      %p210 = pneg %p118
      %s211 = smul.u32 2, %s21
      %p212 = scmp.lt.s32.totalorder %s20, 1
      %s213 = scalar_select %p212, %s20, 1
      %p214 = scmp.lt.s32.totalorder %s211, 1
      %s215 = scalar_select %p214, %s211, 1
      %s216 = smul.addr %s213, 2
      %s217 = sadd.s32 %s215, %s216
      %s218 = smul.addr %s217, 4
      %s219 = scalar_lea.vmem %s3, %s218
      %p220 = pneg %p149
      %p221 = pneg %p146
      %s222 = smul.u32 2, %s21
      %p223 = scmp.lt.s32.totalorder %s20, 1
      %s224 = scalar_select %p223, %s20, 1
      %p225 = scmp.lt.s32.totalorder %s222, 1
      %s226 = scalar_select %p225, %s222, 1
      %s227 = smul.addr %s224, 4
      %s228 = sadd.s32 %s226, %s227
      %s229 = smul.addr %s228, 8
      %s230 = scalar_lea.vmem %s4, %s229
      %s231 = smul.u32 2, %s21
      %p232 = scmp.lt.s32.totalorder %s20, 1
      %s233 = scalar_select %p232, %s20, 1
      %p234 = scmp.lt.s32.totalorder %s231, 1
      %s235 = scalar_select %p234, %s231, 1
      %s236 = smul.addr %s233, 2
      %s237 = sadd.s32 %s235, %s236
      %s238 = smul.addr %s237, 4
      %s239 = scalar_lea.vmem %s0, %s238
      %s240 = smul.u32 2, %s21
      %s241 = smul.u32 2, %s21
      %p242 = scmp.lt.s32.totalorder %s20, 1
      %s243 = scalar_select %p242, %s20, 1
      %p244 = scmp.lt.s32.totalorder %s241, 1
      %s245 = scalar_select %p244, %s241, 1
      %s246 = smul.addr %s243, 2
      %s247 = sadd.s32 %s245, %s246
      %s248 = smul.addr %s247, 4
      %s249 = scalar_lea.vmem %s3, %s248
      %s250 = smul.u32 2, %s21
      %s251 = smul.u32 2, %s21
      %p252 = scmp.lt.s32.totalorder %s20, 1
      %s253 = scalar_select %p252, %s20, 1
      %p254 = scmp.lt.s32.totalorder %s251, 1
      %s255 = scalar_select %p254, %s251, 1
      %s256 = smul.addr %s253, 4
      %s257 = sadd.s32 %s255, %s256
      %s258 = smul.addr %s257, 8
      %s259 = scalar_lea.vmem %s4, %s258
      %s260 = smul.u32 2, %s21
      %v261 = vld [vmem:[%s239] sm:$0xff]
      %v262 = vld [vmem:[%s1] sm:$0xff]
      %v263 = vld [vmem:[%s1 + $0x8] sm:$0xff]
      %v264 = vld [vmem:[%s1 + $0x10] sm:$0xf]
      %v265 = vld [vmem:[%s2] sm:$0xff]
      %v266 = vld [vmem:[%s2 + $0x8] sm:$0xff]
      %v267 = vld [vmem:[%s2 + $0x10] sm:$0xf]
      %269 = vset.pattern.permute.xlu0 0
      %270 = vperm.xlu0 %269, %v265
      %v271 = vpop.permute.xlu0 %270
      %274 = vset.pattern.permute.xlu0 0
      %275 = vperm.xlu0 %274, %v266
      %v276 = vpop.permute.xlu0 %275
      %279 = vset.pattern.permute.xlu0 0
      %280 = vperm.xlu0 %279, %v267
      %v281 = vpop.permute.xlu0 %280
      %v284 = vcombine.high %v261, %v261
      %vm285 = vcmask 31744
      %v287 = vsel %vm285, %v262, 0
      %v290 = vsel %vm285, %v263, 0
      %v293 = vsel %vm285, %v264, 0
      %vm295 = vcmask 1043456
      %v296 = vsel %vm295, %v261, 0
      %v298 = vsel %vm295, %v284, 0
      %300 = vmatprep.subr.mxu0 %v298
      %301 = vmatpush1.msra.mxu0 %v296
      %302 = vmatprep.subr.mxu0 0.0
      %303 = vmatpush1.msra.mxu0 0.0
      %304 = vmatprep.subr.mxu0 0.0
      %305 = vmatpush1.msra.mxu0 0.0
      %306 = vmatprep.subr.mxu0 0.0
      %307 = vmatpush1.msra.mxu0 0.0
      %308 = vmatprep.subr.mxu0 0.0
      %309 = vmatpush1.msra.mxu0 0.0
      %310 = vmatprep.subr.mxu0 0.0
      %311 = vmatpush1.msra.mxu0 0.0
      %312 = vmatprep.subr.mxu0 0.0
      %313 = vmatpush1.msra.mxu0 0.0
      %314 = vmatprep.subr.mxu0 0.0
      %315 = vmatpush1.msra.mxu0 0.0
      %316 = vmatprep.subr.mxu0 0.0
      %317 = vmatpush1.msra.mxu0 0.0
      %318 = vmatprep.subr.mxu0 0.0
      %319 = vmatpush1.msra.mxu0 0.0
      %320 = vmatprep.subr.mxu0 0.0
      %321 = vmatpush1.msra.mxu0 0.0
      %322 = vmatprep.subr.mxu0 0.0
      %323 = vmatpush1.msra.mxu0 0.0
      %324 = vmatprep.subr.mxu0 0.0
      %325 = vmatpush1.msra.mxu0 0.0
      %326 = vmatprep.subr.mxu0 0.0
      %327 = vmatpush1.msra.mxu0 0.0
      %328 = vmatprep.subr.mxu0 0.0
      %329 = vmatpush1.msra.mxu0 0.0
      %330 = vmatprep.subr.mxu0 0.0
      %331 = vmatpush1.msra.mxu0 0.0
      %332 = vmatprep.subr.mxu0 0.0
      %333 = vmatpush1.msra.mxu0 0.0
      %334 = vmatprep.subr.mxu0 0.0
      %335 = vmatpush1.msra.mxu0 0.0
      %336 = vmatprep.subr.mxu0 0.0
      %337 = vmatpush1.msra.mxu0 0.0
      %338 = vmatprep.subr.mxu0 0.0
      %339 = vmatpush1.msra.mxu0 0.0
      %340 = vmatprep.subr.mxu0 0.0
      %341 = vmatpush1.msra.mxu0 0.0
      %342 = vmatprep.subr.mxu0 0.0
      %343 = vmatpush1.msra.mxu0 0.0
      %344 = vmatprep.subr.mxu0 0.0
      %345 = vmatpush1.msra.mxu0 0.0
      %346 = vmatprep.subr.mxu0 0.0
      %347 = vmatpush1.msra.mxu0 0.0
      %348 = vmatprep.subr.mxu0 0.0
      %349 = vmatpush1.msra.mxu0 0.0
      %350 = vmatprep.subr.mxu0 0.0
      %351 = vmatpush1.msra.mxu0 0.0
      %352 = vmatprep.subr.mxu0 0.0
      %353 = vmatpush1.msra.mxu0 0.0
      %354 = vmatprep.subr.mxu0 0.0
      %355 = vmatpush1.msra.mxu0 0.0
      %356 = vmatprep.subr.mxu0 0.0
      %357 = vmatpush1.msra.mxu0 0.0
      %358 = vmatprep.subr.mxu0 0.0
      %359 = vmatpush1.msra.mxu0 0.0
      %360 = vmatprep.subr.mxu0 0.0
      %361 = vmatpush1.msra.mxu0 0.0
      %362 = vmatprep.subr.mxu0 0.0
      %363 = vmatpush1.msra.mxu0 0.0
      %364 = vmatprep.mubr.f32.mxu0 0.0
      %365 = vmatmul.mubr.f32.gmra.mrb[0].mxu0 %v287
      %v366 = vpop.f32.mrb[0].mxu0
      %v367 = vadd.f32 %v271, %v366
      %v368 = vpop.f32.mrb[0].mxu0
      %v369 = vadd.f32 %v271, %v368
      %370 = vmatprep.mubr.f32.mxu0 0.0
      %371 = vmatmul.mubr.f32.gmra.mrb[0].mxu0 %v290
      %v372 = vpop.f32.mrb[0].mxu0
      %v373 = vadd.f32 %v276, %v372
      %v374 = vpop.f32.mrb[0].mxu0
      %v375 = vadd.f32 %v276, %v374
      %376 = vmatprep.mubr.f32.mxu0 0.0
      %377 = vmatmul.mubr.f32.gmra.mrb[0].mxu0 %v293
      %v378 = vpop.f32.mrb[0].mxu0
      %v379 = vadd.f32 %v281, %v378
      %v380 = vpop.f32.mrb[0].mxu0
      %v381 = vadd.f32 %v281, %v380
      %382 = vdwg.mxu0
      %v385 = vcombine.low %v367, %v369
      %387 = vst [vmem:[%s249] sm:$0x77] %v385
      %388 = vst [vmem:[%s259] sm:$0xff] %v373
      %389 = vst [vmem:[%s259 + $0x8] sm:$0xff] %v375
      %390 = vst [vmem:[%s259 + $0x10] sm:$0xf] %v379
      %391 = vst [vmem:[%s259 + $0x18] sm:$0xf] %v381
      %s392 = smul.u32 2, %s21
      %p393 = scmp.lt.s32.totalorder %s20, 1
      %s394 = scalar_select %p393, %s20, 1
      %p395 = scmp.lt.s32.totalorder %s392, 1
      %s396 = scalar_select %p395, %s392, 1
      %s397 = smul.addr %s394, 2
      %s398 = sadd.s32 %s396, %s397
      %s399 = smul.addr %s398, 4
      %s400 = scalar_lea.vmem %s3, %s399
      %s401 = smul.u32 2, %s21
      %p402 = scmp.lt.s32.totalorder %s20, 1
      %s403 = scalar_select %p402, %s20, 1
      %p404 = scmp.lt.s32.totalorder %s401, 1
      %s405 = scalar_select %p404, %s401, 1
      %s406 = smul.addr %s403, 4
      %s407 = sadd.s32 %s405, %s406
      %s408 = smul.addr %s407, 8
      %s409 = scalar_lea.vmem %s4, %s408
      // Predicated region
      $region33: #{_rpn_head_packed.1} parent=31 // pred_check
        %p410 = pneg %p118
      $region34: #{_rpn_head_packed.1} parent=31 // pred_check_branch
        %412 = sbr.rel (%p410) target = $region36
      $region35: #{_rpn_head_packed.1} parent=31 // pred_region
        %s413 = smul.u32 2, %s21
      $region36: #{_rpn_head_packed.1} parent=31 // pred_fallthru
        _
      // Predicated region
      $region37: #{_rpn_head_packed.1} parent=31 // pred_check
        %p414 = pneg %p146
      $region38: #{_rpn_head_packed.1} parent=31 // pred_check_branch
        %416 = sbr.rel (%p414) target = $region40
      $region39: #{_rpn_head_packed.1} parent=31 // pred_region
        %s417 = smul.u32 2, %s21
      $region40: #{_rpn_head_packed.1} parent=31 // pred_fallthru
        _
    $region32: #{_rpn_head_packed.1} parent=5 // pred_fallthru
      _
    %p418 = scmp.le.s32.totalorder 2, %s11
    // Predicated region
    $region41: #{_rpn_head_packed.1} parent=5 // pred_check
      %p419 = pneg %p418
    $region42: #{_rpn_head_packed.1} parent=5 // pred_check_branch
      %421 = sbr.rel (%p419) target = $region44
    $region43: #{_rpn_head_packed.1} parent=5 // pred_region
      %s422 = ssub.s32 %s11, 2
      // Predicated region
      $region45: #{_rpn_head_packed.1} parent=43 // pred_check
        %p423 = pneg %p124
      $region46: #{_rpn_head_packed.1} parent=43 // pred_check_branch
        %425 = sbr.rel (%p423) target = $region48
      $region47: #{_rpn_head_packed.1} parent=43 // pred_region
        %s426 = smul.u32 2, %s23
        %p427 = scmp.lt.s32.totalorder %s22, 1
        %s428 = scalar_select %p427, %s22, 1
        %p429 = scmp.lt.s32.totalorder %s426, 1
        %s430 = scalar_select %p429, %s426, 1
        %s431 = smul.addr %s428, 2
        %s432 = sadd.s32 %s430, %s431
        %s433 = smul.addr %s432, 4
        %s434 = scalar_lea.vmem %s3, %s433
      $region48: #{_rpn_head_packed.1} parent=43 // pred_fallthru
        _
      // Predicated region
      $region49: #{_rpn_head_packed.1} parent=43 // pred_check
        %p435 = pneg %p152
      $region50: #{_rpn_head_packed.1} parent=43 // pred_check_branch
        %437 = sbr.rel (%p435) target = $region52
      $region51: #{_rpn_head_packed.1} parent=43 // pred_region
        %s438 = smul.u32 2, %s23
        %p439 = scmp.lt.s32.totalorder %s22, 1
        %s440 = scalar_select %p439, %s22, 1
        %p441 = scmp.lt.s32.totalorder %s438, 1
        %s442 = scalar_select %p441, %s438, 1
        %s443 = smul.addr %s440, 4
        %s444 = sadd.s32 %s442, %s443
        %s445 = smul.addr %s444, 8
        %s446 = scalar_lea.vmem %s4, %s445
      $region52: #{_rpn_head_packed.1} parent=43 // pred_fallthru
        _
    $region44: #{_rpn_head_packed.1} parent=5 // pred_fallthru
      _
  $region6: #{_rpn_head_packed.1} parent=0 // loop_footer
    %s15 = sadd.s32 1, %s11
  $region7: #{_rpn_head_packed.1} parent=0 // loop_footer_branch
    %10 = sbr.rel target = $region3
  $region8: #{_rpn_head_packed.1} parent=0 // loop_exit
    _

</llo_original>
